<compile_context>
chip_gen: v7x
topology: tpu7x:2x2x1
jax: 0.10.0
libtpu: 0.0.40
codegen_flags: <defaults>
</compile_context>

<pallas_src>
import functools

import jax
import jax.numpy as jnp
from jax.experimental import pallas as pl
from jax.experimental.pallas import tpu as pltpu

LN_EPS = 1e-5  # PyTorch nn.LayerNorm default


def _round_up(x, m):
    return (x + m - 1) // m * m


def _patch_embed_kernel(x_ref, w_ref, vec_ref, o_ref, *, e_dim):
    # x_ref:   (tile_m, K) bf16 patch rows (streamed)
    # w_ref:   (K, E)      bf16 weight (resident across the grid)
    # vec_ref: (3, E)      f32  [conv bias; LN gamma; LN beta] (resident)
    # o_ref:   (tile_m, E) out_dtype
    y = jnp.dot(x_ref[...], w_ref[...], preferred_element_type=jnp.float32)
    vec = vec_ref[...]
    y = y + vec[0:1, :]  # f32 bias add on the f32 accumulator

    # Single-pass LayerNorm statistics over the real E columns (no padding).
    inv_e = jnp.float32(1.0 / e_dim)
    s = jnp.sum(y, axis=-1, keepdims=True)
    ss = jnp.sum(y * y, axis=-1, keepdims=True)
    mean = s * inv_e
    var = jnp.maximum(ss * inv_e - mean * mean, 0.0)

    y = (y - mean) * jax.lax.rsqrt(var + LN_EPS)
    y = y * vec[1:2, :] + vec[2:3, :]
    o_ref[...] = y.astype(o_ref.dtype)


def _pick_tile_m(m, target):
    """Largest multiple-of-8 tile <= target that divides M (or M itself).

    Returns (tile_m, needs_m_padding)."""
    target = max(8, min(target, m))
    if m <= target:
        return m, False  # single tile; block dim == full dim is always legal
    t = (target // 8) * 8
    while t >= 8:
        if m % t == 0:
            return t, False
        t -= 8
    # No usable divisor: fall back to padding M (rare; costs one output slice).
    return (target // 8) * 8, True


def patch_embed_generic(x, conv_w, conv_b, ln_gamma, ln_beta, patch_size,
                        *, tile_m=512, compute_dtype=jnp.bfloat16, out_dtype=None):
    """Forward pass of PatchEmbedGeneric (Conv2d stride==kernel + LayerNorm).

    x:        (B, Cin, H, W)   NCHW, like PyTorch
    conv_w:   (E, Cin, P, P)   Conv2d weight (kernel_size == stride == P)
    conv_b:   (E,)             Conv2d bias
    ln_gamma: (E,)             LayerNorm weight
    ln_beta:  (E,)             LayerNorm bias
    returns:  (B, Np, E)       with Np = (H//P) * (W//P), dtype out_dtype
    """
    B, Cin, H, W = x.shape
    P = patch_size
    assert H % P == 0 and W % P == 0, "spatial dims must be divisible by patch size"
    E = conv_w.shape[0]
    Hp, Wp = H // P, W // P
    Np = Hp * Wp
    M = B * Np
    K = Cin * P * P
    out_dtype = x.dtype if out_dtype is None else out_dtype
    out_bytes = jnp.dtype(out_dtype).itemsize

    # VMEM budget: 2x streamed input block + 2x output block + resident weight
    # + resident (3,E) vectors, kept under ~12 MiB (inside v5e's 16 MiB scoped
    # default, and well inside v7x's 32 MiB scoped / 64 MiB physical).
    resident_bytes = K * E * 2 + 3 * E * 4
    per_row_bytes = 2 * (K * 2 + E * out_bytes)
    budget = 12 * 1024 * 1024
    max_rows = max(8, (budget - resident_bytes) // per_row_bytes)
    tile_m_eff, need_pad = _pick_tile_m(M, min(tile_m, max_rows))

    # --- glue: NCHW -> patch matrix (M, K), flattened in (c, kh, kw) order to
    # match the Conv2d weight layout (E, Cin, P, P).  One fused XLA
    # transpose+cast pass; no K padding, so the streamed bytes are minimal.
    # TODO(synk): fold this patchification into the kernel's DMA to remove this
    # extra HBM pass over X entirely (see header note).
    xp = x.reshape(B, Cin, Hp, P, Wp, P)
    xp = jnp.transpose(xp, (0, 2, 4, 1, 3, 5)).reshape(M, K).astype(compute_dtype)

    M_pad = M
    if need_pad:
        M_pad = _round_up(M, tile_m_eff)
        xp = jnp.pad(xp, ((0, M_pad - M), (0, 0)))

    # Conv weight -> matmul weight (K, E), bf16, resident in VMEM.
    w_mat = conv_w.reshape(E, K).T.astype(compute_dtype)
    # Pack bias / gamma / beta into one resident (3, E) f32 array.
    vec = jnp.stack([conv_b, ln_gamma, ln_beta]).astype(jnp.float32)

    kernel = functools.partial(_patch_embed_kernel, e_dim=E)
    grid = (M_pad // tile_m_eff,)

    out = pl.pallas_call(
        kernel,
        out_shape=jax.ShapeDtypeStruct((M_pad, E), out_dtype),
        grid=grid,
        in_specs=[
            pl.BlockSpec((tile_m_eff, K), lambda i: (i, 0)),  # streamed patch rows
            pl.BlockSpec((K, E), lambda i: (0, 0)),           # resident weight
            pl.BlockSpec((3, E), lambda i: (0, 0)),           # resident b/gamma/beta
        ],
        out_specs=pl.BlockSpec((tile_m_eff, E), lambda i: (i, 0)),
        compiler_params=pltpu.CompilerParams(
            dimension_semantics=("parallel",),
        ),
    )(xp, w_mat, vec)

    if need_pad:
        out = out[:M]
    return out.reshape(B, Np, E)


def _reference(x, conv_w, conv_b, ln_gamma, ln_beta, patch_size, compute_dtype):
    """Pure-JAX reference mirroring the PyTorch module (with the same bf16
    rounding of the matmul operands that the kernel applies)."""
    xq = x.astype(compute_dtype).astype(jnp.float32)
    wq = conv_w.astype(compute_dtype).astype(jnp.float32)
    y = jax.lax.conv_general_dilated(
        xq, wq,
        window_strides=(patch_size, patch_size),
        padding="VALID",
        dimension_numbers=("NCHW", "OIHW", "NCHW"),
        precision=jax.lax.Precision.HIGHEST,
    ) + conv_b[None, :, None, None]
    B, E, Hp, Wp = y.shape
    y = y.reshape(B, E, Hp * Wp).transpose(0, 2, 1)   # flatten(2).transpose(1, 2)
    mean = jnp.mean(y, axis=-1, keepdims=True)
    var = jnp.mean((y - mean) ** 2, axis=-1, keepdims=True)
    y = (y - mean) / jnp.sqrt(var + LN_EPS)
    return y * ln_gamma + ln_beta


if __name__ == "__main__":
    # Small shapes consistent with the module:
    # proj_stem = [Conv2d(4, 32, kernel_size=4, stride=4)], norm_layer = LayerNorm(32)
    B, Cin, H, W = 2, 4, 16, 16
    P, E = 4, 32

    key = jax.random.PRNGKey(0)
    kx, kw, kb, kg, kbt = jax.random.split(key, 5)

    x = jax.random.normal(kx, (B, Cin, H, W), dtype=jnp.float32)
    conv_w = jax.random.normal(kw, (E, Cin, P, P), dtype=jnp.float32) * 0.05
    conv_b = jax.random.normal(kb, (E,), dtype=jnp.float32) * 0.01
    ln_gamma = 1.0 + 0.1 * jax.random.normal(kg, (E,), dtype=jnp.float32)
    ln_beta = 0.05 * jax.random.normal(kbt, (E,), dtype=jnp.float32)

    out = patch_embed_generic(x, conv_w, conv_b, ln_gamma, ln_beta, P)
    out = jax.block_until_ready(out)

    ref = _reference(x, conv_w, conv_b, ln_gamma, ln_beta, P, jnp.bfloat16)
    assert out.shape == (B, (H // P) * (W // P), E), out.shape
    assert jnp.allclose(out, ref, atol=2e-3, rtol=2e-3), "mismatch vs reference"

    print("KERNEL_OK")
</pallas_src>

<mosaic_0001>
module attributes {stable_mosaic.version = 11 : i64} {
  func.func @_patch_embed_kernel(%arg0: i32, %arg1: memref<32x64xbf16, #tpu.memory_space<vmem>>, %arg2: memref<64x32xbf16, #tpu.memory_space<vmem>>, %arg3: memref<3x32xf32, #tpu.memory_space<vmem>>, %arg4: memref<32x32xf32, #tpu.memory_space<vmem>>) attributes {dimension_semantics = [#tpu.dimension_semantics<parallel>], iteration_bounds = array<i64: 1>, scalar_prefetch = 0 : i64, scratch_operands = 0 : i64, tpu.core_type = #tpu.core_type<tc>, window_params = [{transform_indices = @transform_0, window_bounds = array<i64: 32, 64>}, {pipeline_mode = #tpu.pipeline_mode<synchronous>, transform_indices = @transform_1, window_bounds = array<i64: 64, 32>}, {pipeline_mode = #tpu.pipeline_mode<synchronous>, transform_indices = @transform_2, window_bounds = array<i64: 3, 32>}, {transform_indices = @transform_3, window_bounds = array<i64: 32, 32>}]} {
    %c0 = arith.constant 0 : index
    %c0_0 = arith.constant 0 : index
    %0 = vector.load %arg1[%c0, %c0_0] : memref<32x64xbf16, #tpu.memory_space<vmem>>, vector<32x64xbf16>
    %c0_1 = arith.constant 0 : index
    %c0_2 = arith.constant 0 : index
    %1 = vector.load %arg2[%c0_1, %c0_2] : memref<64x32xbf16, #tpu.memory_space<vmem>>, vector<64x32xbf16>
    %cst = arith.constant dense<0.000000e+00> : vector<32x32xf32>
    %2 = tpu.matmul %0, %1, %cst {dimension_numbers = #tpu.dot_dimension_numbers<[1], [0], [0], [1], [0, 0, 1, 1], [], []>} : vector<32x64xbf16>, vector<64x32xbf16>, vector<32x32xf32> -> vector<32x32xf32>
    %c0_3 = arith.constant 0 : index
    %c0_4 = arith.constant 0 : index
    %3 = vector.load %arg3[%c0_3, %c0_4] : memref<3x32xf32, #tpu.memory_space<vmem>>, vector<3x32xf32>
    %4 = vector.extract_strided_slice %3 {offsets = [0, 0], sizes = [1, 32], strides = [1, 1]} : vector<3x32xf32> to vector<1x32xf32>
    %5 = vector.broadcast %4 : vector<1x32xf32> to vector<32x32xf32>
    %6 = arith.addf %2, %5 : vector<32x32xf32>
    %cst_5 = arith.constant dense<0.000000e+00> : vector<32xf32>
    %7 = vector.multi_reduction <add>, %6, %cst_5 [1] : vector<32x32xf32> to vector<32xf32>
    %8 = vector.shape_cast %7 : vector<32xf32> to vector<32x1xf32>
    %9 = arith.mulf %6, %6 : vector<32x32xf32>
    %cst_6 = arith.constant dense<0.000000e+00> : vector<32xf32>
    %10 = vector.multi_reduction <add>, %9, %cst_6 [1] : vector<32x32xf32> to vector<32xf32>
    %11 = vector.shape_cast %10 : vector<32xf32> to vector<32x1xf32>
    %cst_7 = arith.constant 3.125000e-02 : f32
    %12 = vector.broadcast %cst_7 : f32 to vector<32x1xf32>
    %13 = arith.mulf %8, %12 : vector<32x1xf32>
    %cst_8 = arith.constant 3.125000e-02 : f32
    %14 = vector.broadcast %cst_8 : f32 to vector<32x1xf32>
    %15 = arith.mulf %11, %14 : vector<32x1xf32>
    %16 = arith.mulf %13, %13 : vector<32x1xf32>
    %17 = arith.subf %15, %16 : vector<32x1xf32>
    %cst_9 = arith.constant 0.000000e+00 : f32
    %18 = vector.broadcast %cst_9 : f32 to vector<32x1xf32>
    %19 = arith.maximumf %17, %18 : vector<32x1xf32>
    %20 = vector.broadcast %13 : vector<32x1xf32> to vector<32x32xf32>
    %21 = arith.subf %6, %20 : vector<32x32xf32>
    %cst_10 = arith.constant 9.99999974E-6 : f32
    %22 = vector.broadcast %cst_10 : f32 to vector<32x1xf32>
    %23 = arith.addf %19, %22 : vector<32x1xf32>
    %24 = math.rsqrt %23 : vector<32x1xf32>
    %25 = vector.broadcast %24 : vector<32x1xf32> to vector<32x32xf32>
    %26 = arith.mulf %21, %25 : vector<32x32xf32>
    %27 = vector.extract_strided_slice %3 {offsets = [1, 0], sizes = [1, 32], strides = [1, 1]} : vector<3x32xf32> to vector<1x32xf32>
    %28 = vector.broadcast %27 : vector<1x32xf32> to vector<32x32xf32>
    %29 = arith.mulf %26, %28 : vector<32x32xf32>
    %30 = vector.extract_strided_slice %3 {offsets = [2, 0], sizes = [1, 32], strides = [1, 1]} : vector<3x32xf32> to vector<1x32xf32>
    %31 = vector.broadcast %30 : vector<1x32xf32> to vector<32x32xf32>
    %32 = arith.addf %29, %31 : vector<32x32xf32>
    %c0_11 = arith.constant 0 : index
    %c0_12 = arith.constant 0 : index
    %33 = vector.load %arg4[%c0_11, %c0_12] : memref<32x32xf32, #tpu.memory_space<vmem>>, vector<32x32xf32>
    tpu.vector_store %arg4[%c0_11, %c0_12], %32 {strides = array<i32>} : memref<32x32xf32, #tpu.memory_space<vmem>>, vector<32x32xf32>,
    return
  }
  func.func @transform_0(%arg0: i32) -> (i32, i32) {
    %c0_i32 = arith.constant 0 : i32
    %c0_i32_0 = arith.constant 0 : i32
    return %arg0, %c0_i32 : i32, i32
  }
  func.func @transform_1(%arg0: i32) -> (i32, i32) {
    %c0_i32 = arith.constant 0 : i32
    %c0_i32_0 = arith.constant 0 : i32
    %c0_i32_1 = arith.constant 0 : i32
    return %c0_i32, %c0_i32_0 : i32, i32
  }
  func.func @transform_2(%arg0: i32) -> (i32, i32) {
    %c0_i32 = arith.constant 0 : i32
    %c0_i32_0 = arith.constant 0 : i32
    %c0_i32_1 = arith.constant 0 : i32
    return %c0_i32, %c0_i32_0 : i32, i32
  }
  func.func @transform_3(%arg0: i32) -> (i32, i32) {
    %c0_i32 = arith.constant 0 : i32
    %c0_i32_0 = arith.constant 0 : i32
    return %arg0, %c0_i32 : i32, i32
  }
}

</mosaic_0001>

<llo_original>
// kernel: tpu_custom_call.1
$region0: #{tpu_custom_call.1}
  #allocation0 [shape = 'u32[]', space=smem, size = 0x4, offset = 0x4, fixed_abs, tag = 'smem constant byte address 0x4 - core index']
  #allocation1 [shape = 'u32[144,128]{1,0:T(1,128)}', space=vmem, size = 0x12000, scoped, tag = 'internal scratch']
  %s0 = inlined_call_operand.vmem [shape: bf16[32,64], index: 0, kind: input, shape index: {}]
  %s1 = inlined_call_operand.vmem [shape: bf16[64,32], index: 1, kind: input, shape index: {}]
  %s2 = inlined_call_operand.vmem [shape: f32[3,32], index: 2, kind: input, shape index: {}]
  %s3 = inlined_call_operand.hbm [shape: f32[32,32], index: 3, kind: output, shape index: {}]
  %s4 = sld [smem:[#allocation0]]
  $region22: #{tpu_custom_call.1} parent=0
    _
  %s6 = ssub.s32 1, %s4
  %s7 = scalar_select 0, %s6, %s4
  $region1: #{tpu_custom_call.1} parent=0
    #allocation2 [shape = 'u8[16384]{0}', space=vmem, size = 0x4000, scoped, tag = 'output window, operand 0, single buffered']
    #allocation3 [shape = 's32[1]{0}', space=sflag, size = 0x4, scoped, tag = 'scoped memory for tpu_custom_call.1']
    %8 = vsyncpa [#allocation3], 0
    // Predicated region
    $region2: #{tpu_custom_call.1} parent=1 // pred_check
      _
    $region3: #{tpu_custom_call.1} parent=1 // pred_check_branch
      %10 = sbr.rel (0) target = $region5
    $region4: #{tpu_custom_call.1} parent=1 // pred_region
      _
    $region5: #{tpu_custom_call.1} parent=1 // pred_fallthru
      _
    // Predicated region
    $region6: #{tpu_custom_call.1} parent=1 // pred_check
      _
    $region7: #{tpu_custom_call.1} parent=1 // pred_check_branch
      %12 = sbr.rel (0) target = $region9
    $region8: #{tpu_custom_call.1} parent=1 // pred_region
      _
    $region9: #{tpu_custom_call.1} parent=1 // pred_fallthru
      _
    // Predicated region
    $region10: #{tpu_custom_call.1} parent=1 // pred_check
      _
    $region11: #{tpu_custom_call.1} parent=1 // pred_check_branch
      %14 = sbr.rel (0) target = $region13
    $region12: #{tpu_custom_call.1} parent=1 // pred_region
      _
    $region13: #{tpu_custom_call.1} parent=1 // pred_fallthru
      _
    %v16 = vld [vmem:[%s0] sm:$0xf]
    %v17 = vld [vmem:[%s0 + $0x4] sm:$0xf]
    %v18 = vld [vmem:[%s0 + $0x8] sm:$0xf]
    %v19 = vld [vmem:[%s0 + $0xc] sm:$0xf]
    %v20 = vld [vmem:[%s1] sm:$0xf]
    %v21 = vld [vmem:[%s1 + $0x4] sm:$0xf]
    %v22 = vld [vmem:[%s1 + $0x8] sm:$0xf]
    %v23 = vld [vmem:[%s1 + $0xc] sm:$0xf]
    %v24 = vld [vmem:[%s1 + $0x10] sm:$0xf]
    %v25 = vld [vmem:[%s1 + $0x14] sm:$0xf]
    %v26 = vld [vmem:[%s1 + $0x18] sm:$0xf]
    %v27 = vld [vmem:[%s1 + $0x1c] sm:$0xf]
    %v28 = vld [vmem:[%s2] sm:$0x7]
    %v29 = vlaneseq
    %v30 = vshrl.u32 %v29, 7
    %v31 = vsub.s32 0, %v30
    %v32 = vrot.slane %v28, %v31
    %v37 = vunpack.c.l.b16 %v16
    %v38 = vunpack.c.l.b16 %v17
    %v39 = vunpack.c.l.b16 %v18
    %v40 = vunpack.c.l.b16 %v19
    %v41 = vpack.c.b16 %v38, %v37
    %v42 = vpack.c.b16 %v40, %v39
    %v51 = vunpack.c.l.b16 %v20
    %v52 = vunpack.c.l.b16 %v21
    %v53 = vunpack.c.l.b16 %v22
    %v54 = vunpack.c.l.b16 %v23
    %v55 = vunpack.c.l.b16 %v24
    %v56 = vunpack.c.l.b16 %v25
    %v57 = vunpack.c.l.b16 %v26
    %v58 = vunpack.c.l.b16 %v27
    %v59 = vpack.c.b16 %v52, %v51
    %v60 = vpack.c.b16 %v54, %v53
    %v61 = vpack.c.b16 %v56, %v55
    %v62 = vpack.c.b16 %v58, %v57
    %vm67 = vcmask 523264
    %v69 = vsel %vm67, %v41, 0
    %v72 = vsel %vm67, %v42, 0
    %74 = vmatprep.subr.bf16.mxu0 0
    %75 = vmatpush1.bf16.msra.mxu0 %v59
    %76 = vmatprep.subr.bf16.mxu0 0
    %77 = vmatpush1.bf16.msra.mxu0 %v60
    %78 = vmatprep.subr.bf16.mxu0 0
    %79 = vmatpush1.bf16.msra.mxu0 %v61
    %80 = vmatprep.subr.bf16.mxu0 0
    %81 = vmatpush1.bf16.msra.mxu0 %v62
    %82 = vmatprep.subr.bf16.mxu0 0
    %83 = vmatpush1.bf16.msra.mxu0 0
    %84 = vmatprep.subr.bf16.mxu0 0
    %85 = vmatpush1.bf16.msra.mxu0 0
    %86 = vmatprep.subr.bf16.mxu0 0
    %87 = vmatpush1.bf16.msra.mxu0 0
    %88 = vmatprep.subr.bf16.mxu0 0
    %89 = vmatpush1.bf16.msra.mxu0 0
    %90 = vmatprep.subr.bf16.mxu0 0
    %91 = vmatpush1.bf16.msra.mxu0 0
    %92 = vmatprep.subr.bf16.mxu0 0
    %93 = vmatpush1.bf16.msra.mxu0 0
    %94 = vmatprep.subr.bf16.mxu0 0
    %95 = vmatpush1.bf16.msra.mxu0 0
    %96 = vmatprep.subr.bf16.mxu0 0
    %97 = vmatpush1.bf16.msra.mxu0 0
    %98 = vmatprep.subr.bf16.mxu0 0
    %99 = vmatpush1.bf16.msra.mxu0 0
    %100 = vmatprep.subr.bf16.mxu0 0
    %101 = vmatpush1.bf16.msra.mxu0 0
    %102 = vmatprep.subr.bf16.mxu0 0
    %103 = vmatpush1.bf16.msra.mxu0 0
    %104 = vmatprep.subr.bf16.mxu0 0
    %105 = vmatpush1.bf16.msra.mxu0 0
    %106 = vmatprep.mubr.bf16.mxu0 0
    %107 = vmatmul.mubr.bf16.gmra.mrb[0].mxu0 %v69
    %v108 = vpop.f32.mrb[0].mxu0
    %v109 = vadd.f32 %v32, %v108
    %v110 = vpop.f32.mrb[0].mxu0
    %v111 = vpop.f32.mrb[0].mxu0
    %v112 = vadd.f32 %v32, %v111
    %v113 = vpop.f32.mrb[0].mxu0
    %114 = vmatprep.mubr.bf16.mxu0 0
    %115 = vmatmul.mubr.bf16.gmra.mrb[0].mxu0 %v72
    %v116 = vpop.f32.mrb[0].mxu0
    %v117 = vadd.f32 %v32, %v116
    %v118 = vpop.f32.mrb[0].mxu0
    %v119 = vpop.f32.mrb[0].mxu0
    %v120 = vadd.f32 %v32, %v119
    %v121 = vpop.f32.mrb[0].mxu0
    %122 = vdwg.mxu0
    %vm123 = vcmask 261120
    %v124 = vsel %vm123, %v109, 0.0
    %125 = vadd.xlane.f32.xlu0 %v124
    %v126 = vpop.xlane.xlu0 %125
    %v127 = vsel %vm123, %v112, 0.0
    %128 = vadd.xlane.f32.xlu0 %v127
    %v129 = vpop.xlane.xlu0 %128
    %v130 = vsel %vm123, %v117, 0.0
    %131 = vadd.xlane.f32.xlu0 %v130
    %v132 = vpop.xlane.xlu0 %131
    %v133 = vsel %vm123, %v120, 0.0
    %134 = vadd.xlane.f32.xlu0 %v133
    %v135 = vpop.xlane.xlu0 %134
    %v136 = vmul.f32 %v109, %v109
    %v137 = vmul.f32 %v112, %v112
    %v138 = vmul.f32 %v117, %v117
    %v139 = vmul.f32 %v120, %v120
    %v140 = vsel %vm123, %v136, 0.0
    %141 = vadd.xlane.f32.xlu0 %v140
    %v142 = vpop.xlane.xlu0 %141
    %v143 = vsel %vm123, %v137, 0.0
    %144 = vadd.xlane.f32.xlu0 %v143
    %v145 = vpop.xlane.xlu0 %144
    %v146 = vsel %vm123, %v138, 0.0
    %147 = vadd.xlane.f32.xlu0 %v146
    %v148 = vpop.xlane.xlu0 %147
    %v149 = vsel %vm123, %v139, 0.0
    %150 = vadd.xlane.f32.xlu0 %v149
    %v151 = vpop.xlane.xlu0 %150
    %v152 = vmul.f32 %v126, 0.03125
    %v153 = vmul.f32 %v129, 0.03125
    %v154 = vmul.f32 %v132, 0.03125
    %v155 = vmul.f32 %v135, 0.03125
    %v156 = vmul.f32 %v142, 0.03125
    %v157 = vmul.f32 %v145, 0.03125
    %v158 = vmul.f32 %v148, 0.03125
    %v159 = vmul.f32 %v151, 0.03125
    %v160 = vmul.f32 %v152, %v152
    %v161 = vmul.f32 %v153, %v153
    %v162 = vmul.f32 %v154, %v154
    %v163 = vmul.f32 %v155, %v155
    %v164 = vsub.f32 %v156, %v160
    %v165 = vsub.f32 %v157, %v161
    %v166 = vsub.f32 %v158, %v162
    %v167 = vsub.f32 %v159, %v163
    %v168 = vmax.f32 %v164, 0.0
    %v169 = vmax.f32 %v165, 0.0
    %v170 = vmax.f32 %v166, 0.0
    %v171 = vmax.f32 %v167, 0.0
    %v172 = vsub.f32 %v109, %v152
    %v173 = vsub.f32 %v112, %v153
    %v174 = vsub.f32 %v117, %v154
    %v175 = vsub.f32 %v120, %v155
    %v176 = vadd.f32 %v168, 1e-05
    %v177 = vadd.f32 %v169, 1e-05
    %v178 = vadd.f32 %v170, 1e-05
    %v179 = vadd.f32 %v171, 1e-05
    %v180 = vrsqrt.pop %v176
    %v181 = vrsqrt.pop %v177
    %v182 = vrsqrt.pop %v178
    %v183 = vrsqrt.pop %v179
    %v184 = vmul.f32 %v172, %v180
    %v185 = vmul.f32 %v173, %v181
    %v186 = vmul.f32 %v174, %v182
    %v187 = vmul.f32 %v175, %v183
    %v188 = vlaneseq
    %v189 = vshrl.u32 %v188, 7
    %v190 = vsub.s32 1, %v189
    %v191 = vrot.slane %v28, %v190
    %v192 = vmul.f32 %v184, %v191
    %v193 = vmul.f32 %v185, %v191
    %v194 = vmul.f32 %v186, %v191
    %v195 = vmul.f32 %v187, %v191
    %v196 = vlaneseq
    %v197 = vshrl.u32 %v196, 7
    %v198 = vsub.s32 2, %v197
    %v199 = vrot.slane %v28, %v198
    %v200 = vadd.f32 %v192, %v199
    %v201 = vadd.f32 %v193, %v199
    %v202 = vadd.f32 %v194, %v199
    %v203 = vadd.f32 %v195, %v199
    %204 = vst.msk [vmem:[#allocation2] sm:$0xff] %vm123, %v200
    %205 = vst.msk [vmem:[#allocation2 + $0x8] sm:$0xff] %vm123, %v201
    %206 = vst.msk [vmem:[#allocation2 + $0x10] sm:$0xff] %vm123, %v202
    %207 = vst.msk [vmem:[#allocation2 + $0x18] sm:$0xff] %vm123, %v203
    // Predicated region
    $region14: #{tpu_custom_call.1} parent=1 // pred_check
      _
    $region15: #{tpu_custom_call.1} parent=1 // pred_check_branch
      %209 = sbr.rel (0) target = $region17
    $region16: #{tpu_custom_call.1} parent=1 // pred_region
      %s211 = ssub.s32 512, 512
      %212 = vsyncadd [#allocation3], %s211
      %s213 = sshll.u32 [#allocation2], 4
      %s214 = int_to_ptr.vmem [resolvable:$true] %s213
      %219 = dma.vmem_to_hbm [thread:$0]  %s214, 512, %s3, [#allocation3], 128, 128, 8
    $region17: #{tpu_custom_call.1} parent=1 // pred_fallthru
      _
    // Predicated region
    $region18: #{tpu_custom_call.1} parent=1 // pred_check
      _
    $region19: #{tpu_custom_call.1} parent=1 // pred_check_branch
      %221 = sbr.rel (0) target = $region21
    $region20: #{tpu_custom_call.1} parent=1 // pred_region
      %222 = dma.done [#allocation3], 512
    $region21: #{tpu_custom_call.1} parent=1 // pred_fallthru
      _
    %223 = vsyncpa [#allocation3], 1

</llo_original>
